<compile_context>
chip_gen: v5e
topology: v5e:2x2
jax: 0.10.0
libtpu: 0.0.40
codegen_flags: <defaults>
</compile_context>

<pallas_src>
import math
from functools import partial

import jax
import jax.numpy as jnp
from jax.experimental import pallas as pl
from jax.experimental.pallas import tpu as pltpu

HIDDEN_SIZE = 128
# Rows per grid step.  Per-step overhead is ~0.35 us, and per-row work for
# this tiny MLP is small, so a large tile amortizes it; 1024 keeps VMEM use
# (< ~2 MiB incl. double buffers + intermediates) far under the scoped limit
# on all of v5e / v6e / v7x while limiting worst-case row padding.
DEFAULT_TILE_M = 1024


def _round_up(n: int, m: int) -> int:
    return ((n + m - 1) // m) * m


def _critic_kernel(s_ref, a_ref,
                   w1s_ref, w1a_ref, b1_ref,
                   w2_ref, b2_ref,
                   w3_ref, b3_ref,
                   w4_ref, b4_ref,
                   o_ref, *, vpu_head: bool):
    """One row-tile of the fused 4-layer MLP (3x ReLU)."""
    # bf16 operands, f32 accumulation on the MXU.  Casts happen in-VMEM so
    # the HBM-side activation traffic stays a single f32 read.
    s = s_ref[...].astype(jnp.bfloat16)
    a = a_ref[...].astype(jnp.bfloat16)

    # Layer 1: fused concat -> split matmul (two small-K MXU passes).
    h = (jnp.dot(s, w1s_ref[...], preferred_element_type=jnp.float32)
         + jnp.dot(a, w1a_ref[...], preferred_element_type=jnp.float32)
         + b1_ref[...])
    h = jnp.maximum(h, 0.0)

    h = jnp.dot(h.astype(jnp.bfloat16), w2_ref[...],
                preferred_element_type=jnp.float32) + b2_ref[...]
    h = jnp.maximum(h, 0.0)

    h = jnp.dot(h.astype(jnp.bfloat16), w3_ref[...],
                preferred_element_type=jnp.float32) + b3_ref[...]
    h = jnp.maximum(h, 0.0)

    if vpu_head:
        # output_size == 1: w4_ref is (1, hidden) f32.  Elementwise mul (VPU)
        # + lane reduction (XLU) -- both off the MXU critical slot.
        out = jnp.sum(h * w4_ref[...], axis=-1, keepdims=True) + b4_ref[...]
    else:
        out = jnp.dot(h.astype(jnp.bfloat16), w4_ref[...],
                      preferred_element_type=jnp.float32) + b4_ref[...]

    o_ref[...] = out.astype(o_ref.dtype)


def _critic_pallas_2d(state2d, action2d, params, tile_m):
    """state2d: (rows, state_dim), action2d: (rows, action_dim) -> (rows, out)."""
    (w1, b1), (w2, b2), (w3, b3), (w4, b4) = params
    rows = state2d.shape[0]
    s_dim = state2d.shape[1]
    a_dim = action2d.shape[1]
    hidden = w1.shape[1]
    out_size = w4.shape[1]
    assert w1.shape[0] == s_dim + a_dim

    # Fuse the concat: split W1 along its input-feature axis.  Weights go to
    # bf16 (halves resident VMEM / weight DMA); biases stay f32.
    w1s = w1[:s_dim].astype(jnp.bfloat16)
    w1a = w1[s_dim:s_dim + a_dim].astype(jnp.bfloat16)
    w2b = w2.astype(jnp.bfloat16)
    w3b = w3.astype(jnp.bfloat16)

    vpu_head = (out_size == 1)
    if vpu_head:
        # (1, hidden) f32 row so it broadcasts across sublanes on the VPU.
        w4k = jnp.reshape(w4, (1, hidden)).astype(jnp.float32)
    else:
        w4k = w4.astype(jnp.bfloat16)
    b1f = b1.astype(jnp.float32)
    b2f = b2.astype(jnp.float32)
    b3f = b3.astype(jnp.float32)
    b4f = b4.astype(jnp.float32)

    # Row tiling: tile is a multiple of 8; pad rows so the grid is uniform
    # and every block stays (8,128)-aligned (no masked sublane epilogues).
    tile = min(tile_m, _round_up(max(rows, 1), 8))
    rows_p = _round_up(rows, tile)
    if rows_p != rows:
        pad = rows_p - rows
        state2d = jnp.pad(state2d, ((0, pad), (0, 0)))
        action2d = jnp.pad(action2d, ((0, pad), (0, 0)))

    grid = (rows_p // tile,)

    def row_spec(ncols):
        return pl.BlockSpec((tile, ncols), lambda i: (i, 0))

    def resident(shape):
        # Same block at every grid step -> loaded once, stays in VMEM.
        return pl.BlockSpec(shape, lambda i: (0, 0))

    out = pl.pallas_call(
        partial(_critic_kernel, vpu_head=vpu_head),
        out_shape=jax.ShapeDtypeStruct((rows_p, out_size), jnp.float32),
        grid=grid,
        in_specs=[
            row_spec(s_dim),
            row_spec(a_dim),
            resident(w1s.shape), resident(w1a.shape), resident(b1f.shape),
            resident(w2b.shape), resident(b2f.shape),
            resident(w3b.shape), resident(b3f.shape),
            resident(w4k.shape), resident(b4f.shape),
        ],
        out_specs=row_spec(out_size),
        compiler_params=pltpu.CompilerParams(
            dimension_semantics=("parallel",),
            vmem_limit_bytes=32 * 1024 * 1024,
        ),
    )(state2d.astype(jnp.float32), action2d.astype(jnp.float32),
      w1s, w1a, b1f, w2b, b2f, w3b, b3f, w4k, b4f)

    return out[:rows]


@partial(jax.jit, static_argnames=("tile_m",))
def critic_forward(state, action, params, tile_m=DEFAULT_TILE_M):
    """Matches Critic.forward (concat fused into the first layer inside the kernel)."""
    if state.ndim == 3:
        B, T, Ds = state.shape
        Da = action.shape[2]
        y = _critic_pallas_2d(state.reshape(B * T, Ds),
                              action.reshape(B * T, Da), params, tile_m)
        return y.reshape(B, T, -1)
    elif state.ndim == 2:
        return _critic_pallas_2d(state, action, params, tile_m)
    else:
        raise ValueError("state must be 2-D or 3-D")


def init_linear(key, in_features, out_features):
    """torch.nn.Linear default init: U(-1/sqrt(fan_in), 1/sqrt(fan_in)).
    Weight stored as (in, out) = W^T of the torch layout; bias as (1, out)."""
    kw, kb = jax.random.split(key)
    bound = 1.0 / math.sqrt(in_features)
    w = jax.random.uniform(kw, (in_features, out_features),
                           minval=-bound, maxval=bound, dtype=jnp.float32)
    b = jax.random.uniform(kb, (1, out_features),
                           minval=-bound, maxval=bound, dtype=jnp.float32)
    return w, b


def init_critic_params(key, input_size, hidden_size, output_size):
    k1, k2, k3, k4 = jax.random.split(key, 4)
    return (
        init_linear(k1, input_size, hidden_size),
        init_linear(k2, hidden_size, hidden_size),
        init_linear(k3, hidden_size, hidden_size),
        init_linear(k4, hidden_size, output_size),
    )


def _reference_forward(state, action, params):
    """Plain-JAX f32 reference (mirrors the PyTorch module)."""
    x = jnp.concatenate([state, action], axis=-1)
    (w1, b1), (w2, b2), (w3, b3), (w4, b4) = params
    x = jnp.maximum(x @ w1 + b1, 0.0)
    x = jnp.maximum(x @ w2 + b2, 0.0)
    x = jnp.maximum(x @ w3 + b3, 0.0)
    return x @ w4 + b4


def _reference_forward_bf16(state, action, params):
    """Emulates the kernel's bf16-operand / f32-accumulate arithmetic."""
    x = jnp.concatenate([state, action], axis=-1)
    (w1, b1), (w2, b2), (w3, b3), (w4, b4) = params

    def mm(a, w):
        return jnp.dot(a.astype(jnp.bfloat16), w.astype(jnp.bfloat16),
                       preferred_element_type=jnp.float32)

    h = jnp.maximum(mm(x, w1) + b1, 0.0)
    h = jnp.maximum(mm(h, w2) + b2, 0.0)
    h = jnp.maximum(mm(h, w3) + b3, 0.0)
    if w4.shape[1] == 1:
        return jnp.sum(h * jnp.reshape(w4, (1, -1)), axis=-1, keepdims=True) + b4
    return mm(h, w4) + b4


if __name__ == "__main__":
    key = jax.random.PRNGKey(0)
    k_state, k_action, k_params, k_s3, k_a3 = jax.random.split(key, 5)

    batch = 2
    state_dim = 24
    action_dim = 8
    input_size = state_dim + action_dim   # 32
    output_size = 1

    params = init_critic_params(k_params, input_size, HIDDEN_SIZE, output_size)

    # 2-D case (B, D)
    state = jax.random.normal(k_state, (batch, state_dim), dtype=jnp.float32)
    action = jax.random.normal(k_action, (batch, action_dim), dtype=jnp.float32)
    out = jax.block_until_ready(critic_forward(state, action, params))
    assert out.shape == (batch, output_size)

    ref_bf = _reference_forward_bf16(state, action, params)
    ref_f32 = _reference_forward(state, action, params)
    assert jnp.allclose(out, ref_bf, atol=2e-3, rtol=2e-3), "kernel vs bf16 reference mismatch"
    assert jnp.allclose(out, ref_f32, atol=3e-2, rtol=3e-2), "kernel vs f32 reference mismatch"

    # 3-D case (B, T, D)
    T = 8
    state3 = jax.random.normal(k_s3, (batch, T, state_dim), dtype=jnp.float32)
    action3 = jax.random.normal(k_a3, (batch, T, action_dim), dtype=jnp.float32)
    out3 = jax.block_until_ready(critic_forward(state3, action3, params))
    assert out3.shape == (batch, T, output_size)
    ref3 = _reference_forward(state3, action3, params)
    assert jnp.allclose(out3, ref3, atol=3e-2, rtol=3e-2), "3-D kernel vs f32 reference mismatch"

    print("KERNEL_OK")
</pallas_src>

<mosaic_0001>
module attributes {stable_mosaic.version = 11 : i64} {
  func.func @_critic_kernel(%arg0: i32, %arg1: memref<8x24xf32, #tpu.memory_space<vmem>>, %arg2: memref<8x8xf32, #tpu.memory_space<vmem>>, %arg3: memref<24x128xbf16, #tpu.memory_space<vmem>>, %arg4: memref<8x128xbf16, #tpu.memory_space<vmem>>, %arg5: memref<1x128xf32, #tpu.memory_space<vmem>>, %arg6: memref<128x128xbf16, #tpu.memory_space<vmem>>, %arg7: memref<1x128xf32, #tpu.memory_space<vmem>>, %arg8: memref<128x128xbf16, #tpu.memory_space<vmem>>, %arg9: memref<1x128xf32, #tpu.memory_space<vmem>>, %arg10: memref<1x128xf32, #tpu.memory_space<vmem>>, %arg11: memref<1x1xf32, #tpu.memory_space<vmem>>, %arg12: memref<8x1xf32, #tpu.memory_space<vmem>>) attributes {dimension_semantics = [#tpu.dimension_semantics<parallel>], iteration_bounds = array<i64: 1>, scalar_prefetch = 0 : i64, scratch_operands = 0 : i64, tpu.core_type = #tpu.core_type<tc>, window_params = [{transform_indices = @transform_0, window_bounds = array<i64: 8, 24>}, {transform_indices = @transform_1, window_bounds = array<i64: 8, 8>}, {pipeline_mode = #tpu.pipeline_mode<synchronous>, transform_indices = @transform_2, window_bounds = array<i64: 24, 128>}, {pipeline_mode = #tpu.pipeline_mode<synchronous>, transform_indices = @transform_3, window_bounds = array<i64: 8, 128>}, {pipeline_mode = #tpu.pipeline_mode<synchronous>, transform_indices = @transform_4, window_bounds = array<i64: 1, 128>}, {pipeline_mode = #tpu.pipeline_mode<synchronous>, transform_indices = @transform_5, window_bounds = array<i64: 128, 128>}, {pipeline_mode = #tpu.pipeline_mode<synchronous>, transform_indices = @transform_6, window_bounds = array<i64: 1, 128>}, {pipeline_mode = #tpu.pipeline_mode<synchronous>, transform_indices = @transform_7, window_bounds = array<i64: 128, 128>}, {pipeline_mode = #tpu.pipeline_mode<synchronous>, transform_indices = @transform_8, window_bounds = array<i64: 1, 128>}, {pipeline_mode = #tpu.pipeline_mode<synchronous>, transform_indices = @transform_9, window_bounds = array<i64: 1, 128>}, {pipeline_mode = #tpu.pipeline_mode<synchronous>, transform_indices = @transform_10, window_bounds = array<i64: 1, 1>}, {transform_indices = @transform_11, window_bounds = array<i64: 8, 1>}]} {
    %c0 = arith.constant 0 : index
    %c0_0 = arith.constant 0 : index
    %0 = vector.load %arg1[%c0, %c0_0] : memref<8x24xf32, #tpu.memory_space<vmem>>, vector<8x24xf32>
    %1 = arith.truncf %0 : vector<8x24xf32> to vector<8x24xbf16>
    %c0_1 = arith.constant 0 : index
    %c0_2 = arith.constant 0 : index
    %2 = vector.load %arg2[%c0_1, %c0_2] : memref<8x8xf32, #tpu.memory_space<vmem>>, vector<8x8xf32>
    %3 = arith.truncf %2 : vector<8x8xf32> to vector<8x8xbf16>
    %c0_3 = arith.constant 0 : index
    %c0_4 = arith.constant 0 : index
    %4 = vector.load %arg3[%c0_3, %c0_4] : memref<24x128xbf16, #tpu.memory_space<vmem>>, vector<24x128xbf16>
    %cst = arith.constant dense<0.000000e+00> : vector<8x128xf32>
    %5 = tpu.matmul %1, %4, %cst {dimension_numbers = #tpu.dot_dimension_numbers<[1], [0], [0], [1], [0, 0, 1, 1], [], []>} : vector<8x24xbf16>, vector<24x128xbf16>, vector<8x128xf32> -> vector<8x128xf32>
    %c0_5 = arith.constant 0 : index
    %c0_6 = arith.constant 0 : index
    %6 = vector.load %arg4[%c0_5, %c0_6] : memref<8x128xbf16, #tpu.memory_space<vmem>>, vector<8x128xbf16>
    %cst_7 = arith.constant dense<0.000000e+00> : vector<8x128xf32>
    %7 = tpu.matmul %3, %6, %cst_7 {dimension_numbers = #tpu.dot_dimension_numbers<[1], [0], [0], [1], [0, 0, 1, 1], [], []>} : vector<8x8xbf16>, vector<8x128xbf16>, vector<8x128xf32> -> vector<8x128xf32>
    %8 = arith.addf %5, %7 : vector<8x128xf32>
    %c0_8 = arith.constant 0 : index
    %c0_9 = arith.constant 0 : index
    %9 = vector.load %arg5[%c0_8, %c0_9] : memref<1x128xf32, #tpu.memory_space<vmem>>, vector<1x128xf32>
    %10 = vector.broadcast %9 : vector<1x128xf32> to vector<8x128xf32>
    %11 = arith.addf %8, %10 : vector<8x128xf32>
    %cst_10 = arith.constant 0.000000e+00 : f32
    %12 = vector.broadcast %cst_10 : f32 to vector<8x128xf32>
    %13 = arith.maximumf %11, %12 : vector<8x128xf32>
    %14 = arith.truncf %13 : vector<8x128xf32> to vector<8x128xbf16>
    %c0_11 = arith.constant 0 : index
    %c0_12 = arith.constant 0 : index
    %15 = vector.load %arg6[%c0_11, %c0_12] : memref<128x128xbf16, #tpu.memory_space<vmem>>, vector<128x128xbf16>
    %cst_13 = arith.constant dense<0.000000e+00> : vector<8x128xf32>
    %16 = tpu.matmul %14, %15, %cst_13 {dimension_numbers = #tpu.dot_dimension_numbers<[1], [0], [0], [1], [0, 0, 1, 1], [], []>} : vector<8x128xbf16>, vector<128x128xbf16>, vector<8x128xf32> -> vector<8x128xf32>
    %c0_14 = arith.constant 0 : index
    %c0_15 = arith.constant 0 : index
    %17 = vector.load %arg7[%c0_14, %c0_15] : memref<1x128xf32, #tpu.memory_space<vmem>>, vector<1x128xf32>
    %18 = vector.broadcast %17 : vector<1x128xf32> to vector<8x128xf32>
    %19 = arith.addf %16, %18 : vector<8x128xf32>
    %cst_16 = arith.constant 0.000000e+00 : f32
    %20 = vector.broadcast %cst_16 : f32 to vector<8x128xf32>
    %21 = arith.maximumf %19, %20 : vector<8x128xf32>
    %22 = arith.truncf %21 : vector<8x128xf32> to vector<8x128xbf16>
    %c0_17 = arith.constant 0 : index
    %c0_18 = arith.constant 0 : index
    %23 = vector.load %arg8[%c0_17, %c0_18] : memref<128x128xbf16, #tpu.memory_space<vmem>>, vector<128x128xbf16>
    %cst_19 = arith.constant dense<0.000000e+00> : vector<8x128xf32>
    %24 = tpu.matmul %22, %23, %cst_19 {dimension_numbers = #tpu.dot_dimension_numbers<[1], [0], [0], [1], [0, 0, 1, 1], [], []>} : vector<8x128xbf16>, vector<128x128xbf16>, vector<8x128xf32> -> vector<8x128xf32>
    %c0_20 = arith.constant 0 : index
    %c0_21 = arith.constant 0 : index
    %25 = vector.load %arg9[%c0_20, %c0_21] : memref<1x128xf32, #tpu.memory_space<vmem>>, vector<1x128xf32>
    %26 = vector.broadcast %25 : vector<1x128xf32> to vector<8x128xf32>
    %27 = arith.addf %24, %26 : vector<8x128xf32>
    %cst_22 = arith.constant 0.000000e+00 : f32
    %28 = vector.broadcast %cst_22 : f32 to vector<8x128xf32>
    %29 = arith.maximumf %27, %28 : vector<8x128xf32>
    %c0_23 = arith.constant 0 : index
    %c0_24 = arith.constant 0 : index
    %30 = vector.load %arg10[%c0_23, %c0_24] : memref<1x128xf32, #tpu.memory_space<vmem>>, vector<1x128xf32>
    %31 = vector.broadcast %30 : vector<1x128xf32> to vector<8x128xf32>
    %32 = arith.mulf %29, %31 : vector<8x128xf32>
    %cst_25 = arith.constant dense<0.000000e+00> : vector<8xf32>
    %33 = vector.multi_reduction <add>, %32, %cst_25 [1] : vector<8x128xf32> to vector<8xf32>
    %34 = vector.shape_cast %33 : vector<8xf32> to vector<8x1xf32>
    %c0_26 = arith.constant 0 : index
    %c0_27 = arith.constant 0 : index
    %35 = vector.load %arg11[%c0_26, %c0_27] : memref<1x1xf32, #tpu.memory_space<vmem>>, vector<1x1xf32>
    %36 = vector.broadcast %35 : vector<1x1xf32> to vector<8x1xf32>
    %37 = arith.addf %34, %36 : vector<8x1xf32>
    %c0_28 = arith.constant 0 : index
    %c0_29 = arith.constant 0 : index
    %38 = vector.load %arg12[%c0_28, %c0_29] : memref<8x1xf32, #tpu.memory_space<vmem>>, vector<8x1xf32>
    tpu.vector_store %arg12[%c0_28, %c0_29], %37 {strides = array<i32>} : memref<8x1xf32, #tpu.memory_space<vmem>>, vector<8x1xf32>,
    return
  }
  func.func @transform_0(%arg0: i32) -> (i32, i32) {
    %c0_i32 = arith.constant 0 : i32
    %c0_i32_0 = arith.constant 0 : i32
    return %arg0, %c0_i32 : i32, i32
  }
  func.func @transform_1(%arg0: i32) -> (i32, i32) {
    %c0_i32 = arith.constant 0 : i32
    %c0_i32_0 = arith.constant 0 : i32
    return %arg0, %c0_i32 : i32, i32
  }
  func.func @transform_2(%arg0: i32) -> (i32, i32) {
    %c0_i32 = arith.constant 0 : i32
    %c0_i32_0 = arith.constant 0 : i32
    %c0_i32_1 = arith.constant 0 : i32
    return %c0_i32, %c0_i32_0 : i32, i32
  }
  func.func @transform_3(%arg0: i32) -> (i32, i32) {
    %c0_i32 = arith.constant 0 : i32
    %c0_i32_0 = arith.constant 0 : i32
    %c0_i32_1 = arith.constant 0 : i32
    return %c0_i32, %c0_i32_0 : i32, i32
  }
  func.func @transform_4(%arg0: i32) -> (i32, i32) {
    %c0_i32 = arith.constant 0 : i32
    %c0_i32_0 = arith.constant 0 : i32
    %c0_i32_1 = arith.constant 0 : i32
    return %c0_i32, %c0_i32_0 : i32, i32
  }
  func.func @transform_5(%arg0: i32) -> (i32, i32) {
    %c0_i32 = arith.constant 0 : i32
    %c0_i32_0 = arith.constant 0 : i32
    %c0_i32_1 = arith.constant 0 : i32
    return %c0_i32, %c0_i32_0 : i32, i32
  }
  func.func @transform_6(%arg0: i32) -> (i32, i32) {
    %c0_i32 = arith.constant 0 : i32
    %c0_i32_0 = arith.constant 0 : i32
    %c0_i32_1 = arith.constant 0 : i32
    return %c0_i32, %c0_i32_0 : i32, i32
  }
  func.func @transform_7(%arg0: i32) -> (i32, i32) {
    %c0_i32 = arith.constant 0 : i32
    %c0_i32_0 = arith.constant 0 : i32
    %c0_i32_1 = arith.constant 0 : i32
    return %c0_i32, %c0_i32_0 : i32, i32
  }
  func.func @transform_8(%arg0: i32) -> (i32, i32) {
    %c0_i32 = arith.constant 0 : i32
    %c0_i32_0 = arith.constant 0 : i32
    %c0_i32_1 = arith.constant 0 : i32
    return %c0_i32, %c0_i32_0 : i32, i32
  }
  func.func @transform_9(%arg0: i32) -> (i32, i32) {
    %c0_i32 = arith.constant 0 : i32
    %c0_i32_0 = arith.constant 0 : i32
    %c0_i32_1 = arith.constant 0 : i32
    return %c0_i32, %c0_i32_0 : i32, i32
  }
  func.func @transform_10(%arg0: i32) -> (i32, i32) {
    %c0_i32 = arith.constant 0 : i32
    %c0_i32_0 = arith.constant 0 : i32
    %c0_i32_1 = arith.constant 0 : i32
    return %c0_i32, %c0_i32_0 : i32, i32
  }
  func.func @transform_11(%arg0: i32) -> (i32, i32) {
    %c0_i32 = arith.constant 0 : i32
    %c0_i32_0 = arith.constant 0 : i32
    return %arg0, %c0_i32 : i32, i32
  }
}

</mosaic_0001>

<llo_original>
// kernel: critic_forward.1
$region0: #{critic_forward.1}
  #allocation0 [shape = 'u32[]', space=smem, size = 0x4, offset = 0x4, fixed_abs, tag = 'smem constant byte address 0x4 - core index']
  #allocation1 [shape = 'u32[72,128]{1,0:T(1,128)}', space=vmem, size = 0x9000, scoped, tag = 'internal scratch']
  #allocation2 [shape = 'f32[1,1]{1,0:T(1,128)S(1)}', space=vmem, size = 0x200, scoped, tag = 'scoped memory for critic_forward.1']
  %s0 = inlined_call_operand.vmem [shape: f32[8,24], index: 0, kind: input, shape index: {}]
  %s1 = inlined_call_operand.vmem [shape: f32[8,8], index: 1, kind: input, shape index: {}]
  %s2 = inlined_call_operand.vmem [shape: bf16[24,128], index: 2, kind: input, shape index: {}]
  %s3 = inlined_call_operand.vmem [shape: bf16[8,128], index: 3, kind: input, shape index: {}]
  %s4 = inlined_call_operand.vmem [shape: f32[1,128], index: 4, kind: input, shape index: {}]
  %s5 = inlined_call_operand.vmem [shape: bf16[128,128], index: 5, kind: input, shape index: {}]
  %s6 = inlined_call_operand.vmem [shape: f32[1,128], index: 6, kind: input, shape index: {}]
  %s7 = inlined_call_operand.vmem [shape: bf16[128,128], index: 7, kind: input, shape index: {}]
  %s8 = inlined_call_operand.vmem [shape: f32[1,128], index: 8, kind: input, shape index: {}]
  %s9 = inlined_call_operand.vmem [shape: f32[1,128], index: 9, kind: input, shape index: {}]
  %s10 = inlined_call_operand.<no memory space> [shape: f32[1,1], index: 10, kind: input, shape index: {}]
  %s11 = inlined_call_operand.vmem [shape: f32[8,1], index: 11, kind: output, shape index: {}]
  %s12 = sld [smem:[#allocation0]]
  $region54: #{critic_forward.1} parent=0
    _
  %s14 = ssub.s32 1, %s12
  %s15 = scalar_select 0, %s14, %s12
  %v16 = vstv %s10
  %17 = vst [vmem:[#allocation2] sm:$0x1] %v16
  // Predicated region
  $region2: #{critic_forward.1} parent=0 // pred_check
    _
  $region3: #{critic_forward.1} parent=0 // pred_check_branch
    %19 = sbr.rel (0) target = $region5
  $region4: #{critic_forward.1} parent=0 // pred_region
    _
  $region5: #{critic_forward.1} parent=0 // pred_fallthru
    _
  // Predicated region
  $region6: #{critic_forward.1} parent=0 // pred_check
    _
  $region7: #{critic_forward.1} parent=0 // pred_check_branch
    %21 = sbr.rel (0) target = $region9
  $region8: #{critic_forward.1} parent=0 // pred_region
    _
  $region9: #{critic_forward.1} parent=0 // pred_fallthru
    _
  // Predicated region
  $region10: #{critic_forward.1} parent=0 // pred_check
    _
  $region11: #{critic_forward.1} parent=0 // pred_check_branch
    %23 = sbr.rel (0) target = $region13
  $region12: #{critic_forward.1} parent=0 // pred_region
    _
  $region13: #{critic_forward.1} parent=0 // pred_fallthru
    _
  // Predicated region
  $region14: #{critic_forward.1} parent=0 // pred_check
    _
  $region15: #{critic_forward.1} parent=0 // pred_check_branch
    %25 = sbr.rel (0) target = $region17
  $region16: #{critic_forward.1} parent=0 // pred_region
    _
  $region17: #{critic_forward.1} parent=0 // pred_fallthru
    _
  // Predicated region
  $region18: #{critic_forward.1} parent=0 // pred_check
    _
  $region19: #{critic_forward.1} parent=0 // pred_check_branch
    %27 = sbr.rel (0) target = $region21
  $region20: #{critic_forward.1} parent=0 // pred_region
    _
  $region21: #{critic_forward.1} parent=0 // pred_fallthru
    _
  // Predicated region
  $region22: #{critic_forward.1} parent=0 // pred_check
    _
  $region23: #{critic_forward.1} parent=0 // pred_check_branch
    %29 = sbr.rel (0) target = $region25
  $region24: #{critic_forward.1} parent=0 // pred_region
    _
  $region25: #{critic_forward.1} parent=0 // pred_fallthru
    _
  // Predicated region
  $region26: #{critic_forward.1} parent=0 // pred_check
    _
  $region27: #{critic_forward.1} parent=0 // pred_check_branch
    %31 = sbr.rel (0) target = $region29
  $region28: #{critic_forward.1} parent=0 // pred_region
    _
  $region29: #{critic_forward.1} parent=0 // pred_fallthru
    _
  // Predicated region
  $region30: #{critic_forward.1} parent=0 // pred_check
    _
  $region31: #{critic_forward.1} parent=0 // pred_check_branch
    %33 = sbr.rel (0) target = $region33
  $region32: #{critic_forward.1} parent=0 // pred_region
    _
  $region33: #{critic_forward.1} parent=0 // pred_fallthru
    _
  // Predicated region
  $region34: #{critic_forward.1} parent=0 // pred_check
    _
  $region35: #{critic_forward.1} parent=0 // pred_check_branch
    %35 = sbr.rel (0) target = $region37
  $region36: #{critic_forward.1} parent=0 // pred_region
    _
  $region37: #{critic_forward.1} parent=0 // pred_fallthru
    _
  // Predicated region
  $region38: #{critic_forward.1} parent=0 // pred_check
    _
  $region39: #{critic_forward.1} parent=0 // pred_check_branch
    %37 = sbr.rel (0) target = $region41
  $region40: #{critic_forward.1} parent=0 // pred_region
    _
  $region41: #{critic_forward.1} parent=0 // pred_fallthru
    _
  // Predicated region
  $region42: #{critic_forward.1} parent=0 // pred_check
    _
  $region43: #{critic_forward.1} parent=0 // pred_check_branch
    %39 = sbr.rel (0) target = $region45
  $region44: #{critic_forward.1} parent=0 // pred_region
    _
  $region45: #{critic_forward.1} parent=0 // pred_fallthru
    _
  %v41 = vld [vmem:[%s0] sm:$0xff]
  %v42 = vpack.c.bf16 %v41, %v41
  %v43 = vld [vmem:[%s1] sm:$0xff]
  %v44 = vpack.c.bf16 %v43, %v43
  %v45 = vld [vmem:[%s2] sm:$0xf]
  %v46 = vld [vmem:[%s2 + $0x4] sm:$0xf]
  %v47 = vld [vmem:[%s2 + $0x8] sm:$0xf]
  %v48 = vld [vmem:[%s3] sm:$0xf]
  %vm49 = vcmask 64512
  %v51 = vsel %vm49, %v44, 0
  %vm53 = vcmask 1043456
  %v55 = vsel %vm53, %v48, 0
  %57 = vmatpush.bf16.msra.mxu0 0
  %58 = vmatpush.bf16.msra.mxu0 0
  %59 = vmatpush.bf16.msra.mxu0 0
  %60 = vmatpush.bf16.msra.mxu0 0
  %61 = vmatpush.bf16.msra.mxu0 0
  %62 = vmatpush.bf16.msra.mxu0 0
  %63 = vmatpush.bf16.msra.mxu0 0
  %64 = vmatpush.bf16.msra.mxu0 %v55
  %65 = vmatmul.bf16.gmra.mxu0 %v51
  %v66 = vpop.f32.mrf.mxu0
  %v67 = vadd.f32 0.0, %v66
  %v68 = vpop.f32.mrf.mxu0
  %69 = vdwg.mxu0
  %v73 = vunpack.c.l.b16 %v45
  %v74 = vunpack.c.l.b16 %v46
  %v75 = vunpack.c.l.b16 %v47
  %v76 = vpack.c.b16 %v74, %v73
  %v77 = vpack.c.b16 %v75, %v75
  %vm79 = vcmask 195584
  %v81 = vsel %vm79, %v42, 0
  %v84 = vsel %vm53, %v77, 0
  %86 = vmatpush.bf16.msra.mxu0 0
  %87 = vmatpush.bf16.msra.mxu0 0
  %88 = vmatpush.bf16.msra.mxu0 0
  %89 = vmatpush.bf16.msra.mxu0 0
  %90 = vmatpush.bf16.msra.mxu0 0
  %91 = vmatpush.bf16.msra.mxu0 0
  %92 = vmatpush.bf16.msra.mxu0 %v84
  %93 = vmatpush.bf16.msra.mxu0 %v76
  %94 = vmatmul.bf16.gmra.mxu0 %v81
  %v95 = vpop.f32.mrf.mxu0
  %v96 = vadd.f32 %v67, %v95
  %v97 = vpop.f32.mrf.mxu0
  %98 = vdwg.mxu0
  %v99 = vld [vmem:[%s4] sm:$0x1]
  %v101 = vperm.slane %v99, 0
  %v103 = vadd.f32 %v96, %v101
  %v104 = vmax.f32 %v103, 0.0
  %v105 = vpack.c.bf16 %v104, %v104
  %v106 = vld [vmem:[%s5] sm:$0xf]
  %v107 = vld [vmem:[%s5 + $0x4] sm:$0xf]
  %v108 = vld [vmem:[%s5 + $0x8] sm:$0xf]
  %v109 = vld [vmem:[%s5 + $0xc] sm:$0xf]
  %v110 = vld [vmem:[%s5 + $0x10] sm:$0xf]
  %v111 = vld [vmem:[%s5 + $0x14] sm:$0xf]
  %v112 = vld [vmem:[%s5 + $0x18] sm:$0xf]
  %v113 = vld [vmem:[%s5 + $0x1c] sm:$0xf]
  %v114 = vld [vmem:[%s5 + $0x20] sm:$0xf]
  %v115 = vld [vmem:[%s5 + $0x24] sm:$0xf]
  %v116 = vld [vmem:[%s5 + $0x28] sm:$0xf]
  %v117 = vld [vmem:[%s5 + $0x2c] sm:$0xf]
  %v118 = vld [vmem:[%s5 + $0x30] sm:$0xf]
  %v119 = vld [vmem:[%s5 + $0x34] sm:$0xf]
  %v120 = vld [vmem:[%s5 + $0x38] sm:$0xf]
  %v121 = vld [vmem:[%s5 + $0x3c] sm:$0xf]
  %v122 = vld [vmem:[%s6] sm:$0x1]
  %v124 = vperm.slane %v122, 0
  %v142 = vunpack.c.l.b16 %v106
  %v143 = vunpack.c.l.b16 %v107
  %v144 = vunpack.c.l.b16 %v108
  %v145 = vunpack.c.l.b16 %v109
  %v146 = vunpack.c.l.b16 %v110
  %v147 = vunpack.c.l.b16 %v111
  %v148 = vunpack.c.l.b16 %v112
  %v149 = vunpack.c.l.b16 %v113
  %v150 = vunpack.c.l.b16 %v114
  %v151 = vunpack.c.l.b16 %v115
  %v152 = vunpack.c.l.b16 %v116
  %v153 = vunpack.c.l.b16 %v117
  %v154 = vunpack.c.l.b16 %v118
  %v155 = vunpack.c.l.b16 %v119
  %v156 = vunpack.c.l.b16 %v120
  %v157 = vunpack.c.l.b16 %v121
  %v158 = vpack.c.b16 %v143, %v142
  %v159 = vpack.c.b16 %v145, %v144
  %v160 = vpack.c.b16 %v147, %v146
  %v161 = vpack.c.b16 %v149, %v148
  %v162 = vpack.c.b16 %v151, %v150
  %v163 = vpack.c.b16 %v153, %v152
  %v164 = vpack.c.b16 %v155, %v154
  %v165 = vpack.c.b16 %v157, %v156
  %174 = vmatpush.bf16.msra.mxu0 %v165
  %175 = vmatpush.bf16.msra.mxu0 %v164
  %176 = vmatpush.bf16.msra.mxu0 %v163
  %177 = vmatpush.bf16.msra.mxu0 %v162
  %178 = vmatpush.bf16.msra.mxu0 %v161
  %179 = vmatpush.bf16.msra.mxu0 %v160
  %180 = vmatpush.bf16.msra.mxu0 %v159
  %181 = vmatpush.bf16.msra.mxu0 %v158
  %182 = vmatmul.bf16.gmra.mxu0 %v105
  %v183 = vpop.f32.mrf.mxu0
  %v184 = vadd.f32 %v124, %v183
  %v185 = vpop.f32.mrf.mxu0
  %186 = vdwg.mxu0
  %v187 = vmax.f32 %v184, 0.0
  %v188 = vpack.c.bf16 %v187, %v187
  %v189 = vld [vmem:[%s7] sm:$0xf]
  %v190 = vld [vmem:[%s7 + $0x4] sm:$0xf]
  %v191 = vld [vmem:[%s7 + $0x8] sm:$0xf]
  %v192 = vld [vmem:[%s7 + $0xc] sm:$0xf]
  %v193 = vld [vmem:[%s7 + $0x10] sm:$0xf]
  %v194 = vld [vmem:[%s7 + $0x14] sm:$0xf]
  %v195 = vld [vmem:[%s7 + $0x18] sm:$0xf]
  %v196 = vld [vmem:[%s7 + $0x1c] sm:$0xf]
  %v197 = vld [vmem:[%s7 + $0x20] sm:$0xf]
  %v198 = vld [vmem:[%s7 + $0x24] sm:$0xf]
  %v199 = vld [vmem:[%s7 + $0x28] sm:$0xf]
  %v200 = vld [vmem:[%s7 + $0x2c] sm:$0xf]
  %v201 = vld [vmem:[%s7 + $0x30] sm:$0xf]
  %v202 = vld [vmem:[%s7 + $0x34] sm:$0xf]
  %v203 = vld [vmem:[%s7 + $0x38] sm:$0xf]
  %v204 = vld [vmem:[%s7 + $0x3c] sm:$0xf]
  %v205 = vld [vmem:[%s8] sm:$0x1]
  %v207 = vperm.slane %v205, 0
  %v225 = vunpack.c.l.b16 %v189
  %v226 = vunpack.c.l.b16 %v190
  %v227 = vunpack.c.l.b16 %v191
  %v228 = vunpack.c.l.b16 %v192
  %v229 = vunpack.c.l.b16 %v193
  %v230 = vunpack.c.l.b16 %v194
  %v231 = vunpack.c.l.b16 %v195
  %v232 = vunpack.c.l.b16 %v196
  %v233 = vunpack.c.l.b16 %v197
  %v234 = vunpack.c.l.b16 %v198
  %v235 = vunpack.c.l.b16 %v199
  %v236 = vunpack.c.l.b16 %v200
  %v237 = vunpack.c.l.b16 %v201
  %v238 = vunpack.c.l.b16 %v202
  %v239 = vunpack.c.l.b16 %v203
  %v240 = vunpack.c.l.b16 %v204
  %v241 = vpack.c.b16 %v226, %v225
  %v242 = vpack.c.b16 %v228, %v227
  %v243 = vpack.c.b16 %v230, %v229
  %v244 = vpack.c.b16 %v232, %v231
  %v245 = vpack.c.b16 %v234, %v233
  %v246 = vpack.c.b16 %v236, %v235
  %v247 = vpack.c.b16 %v238, %v237
  %v248 = vpack.c.b16 %v240, %v239
  %257 = vmatpush.bf16.msra.mxu0 %v248
  %258 = vmatpush.bf16.msra.mxu0 %v247
  %259 = vmatpush.bf16.msra.mxu0 %v246
  %260 = vmatpush.bf16.msra.mxu0 %v245
  %261 = vmatpush.bf16.msra.mxu0 %v244
  %262 = vmatpush.bf16.msra.mxu0 %v243
  %263 = vmatpush.bf16.msra.mxu0 %v242
  %264 = vmatpush.bf16.msra.mxu0 %v241
  %265 = vmatmul.bf16.gmra.mxu0 %v188
  %v266 = vpop.f32.mrf.mxu0
  %v267 = vadd.f32 %v207, %v266
  %v268 = vpop.f32.mrf.mxu0
  %269 = vdwg.mxu0
  %v270 = vmax.f32 %v267, 0.0
  %v271 = vld [vmem:[%s9] sm:$0x1]
  %v273 = vperm.slane %v271, 0
  %v275 = vmul.f32 %v270, %v273
  %276 = vadd.xlane.f32.xlu0 %v275
  %v277 = vpop.xlane.xlu0 %276
  %v278 = vld [vmem:[#allocation2] sm:$0x1]
  %v280 = vperm.slane %v278, 0
  %v282 = vadd.f32 %v277, %v280
  %vm283 = vcmask 7168
  %284 = vst.msk [vmem:[%s11] sm:$0xff] %vm283, %v282
  // Predicated region
  $region46: #{critic_forward.1} parent=0 // pred_check
    _
  $region47: #{critic_forward.1} parent=0 // pred_check_branch
    %286 = sbr.rel (0) target = $region49
  $region48: #{critic_forward.1} parent=0 // pred_region
    _
  $region49: #{critic_forward.1} parent=0 // pred_fallthru
    _
  // Predicated region
  $region50: #{critic_forward.1} parent=0 // pred_check
    _
  $region51: #{critic_forward.1} parent=0 // pred_check_branch
    %288 = sbr.rel (0) target = $region53
  $region52: #{critic_forward.1} parent=0 // pred_region
    _
  $region53: #{critic_forward.1} parent=0 // pred_fallthru
    _

</llo_original>
